<compile_context>
chip_gen: v5e
topology: v5e:2x2
jax: 0.10.0
libtpu: 0.0.40
codegen_flags: <defaults>
</compile_context>

<pallas_src>
import functools
import math

import jax
import jax.numpy as jnp
from jax.experimental import pallas as pl
from jax.experimental.pallas import tpu as pltpu

_LANE = 128
_SUBLANE = 8
_TARGET_BLOCK_BYTES = 1 << 20            # ~1 MiB lane-dense input blocks
_VMEM_LIMIT_BYTES = 32 * 1024 * 1024     # safe on v5e / v6e / v7x


def _round_up(x, m):
    return ((x + m - 1) // m) * m


def _plan(x, input_dim, block_rows):
    """Choose the 2-D layout and row tiling for the kernels."""
    feat = x.shape[-1]
    # TODO(synk): torch.split allows a ragged final chunk; not supported here.
    assert feat % input_dim == 0, "last dim must be a multiple of input_dim"
    n_chunks = feat // input_dim
    rows = math.prod(x.shape[:-1])
    if input_dim % _LANE == 0:
        # Fold chunks into rows: contiguous (rows * n_chunks, input_dim) view.
        n_rows, width, k_chunks = rows * n_chunks, input_dim, 1
    else:
        # Keep the full feature width lane-dense; slice chunks inside kernel.
        n_rows, width, k_chunks = rows, feat, n_chunks
    itemsize = jnp.dtype(x.dtype).itemsize
    if block_rows is None:
        block_rows = max(_SUBLANE, _TARGET_BLOCK_BYTES // max(1, width * itemsize))
        block_rows = min(block_rows, _round_up(n_rows, _SUBLANE))
    block_rows = max(_SUBLANE, (block_rows // _SUBLANE) * _SUBLANE)
    num_tiles = (n_rows + block_rows - 1) // block_rows
    return rows, n_rows, width, k_chunks, block_rows, num_tiles


# ----------------------------- forward kernel -----------------------------

def _safn_fwd_kernel(x_ref, partial_ref, *, delta, chunk_dim, n_chunks,
                     block_rows, total_rows):
    t = pl.program_id(0)
    x = x_ref[...].astype(jnp.float32)                      # (block_rows, width)
    err = jnp.zeros((block_rows, 1), jnp.float32)
    for c in range(n_chunks):                               # static, small
        chunk = x[:, c * chunk_dim:(c + 1) * chunk_dim]
        sumsq = jnp.sum(chunk * chunk, axis=-1, keepdims=True)
        norm = jnp.sqrt(sumsq)                              # per-row L2 norm
        radius = jax.lax.stop_gradient(norm) + jnp.float32(delta)
        err = err + (norm - radius) ** 2
    # Mask rows past the end of the (possibly ragged) last tile.
    row_ids = t * block_rows + jax.lax.broadcasted_iota(
        jnp.int32, (block_rows, 1), 0)
    err = jnp.where(row_ids < total_rows, err, 0.0)
    partial_ref[0, 0] = jnp.sum(err)                        # per-tile partial


def _safn_forward(x, input_dim, delta, block_rows):
    rows, n_rows, width, k_chunks, tile_r, num_tiles = _plan(x, input_dim, block_rows)
    x2 = jnp.reshape(x, (n_rows, width))                    # free row-major view
    kernel = functools.partial(
        _safn_fwd_kernel, delta=float(delta), chunk_dim=input_dim,
        n_chunks=k_chunks, block_rows=tile_r, total_rows=n_rows)
    partials = pl.pallas_call(
        kernel,
        out_shape=jax.ShapeDtypeStruct((num_tiles, 1), jnp.float32),
        grid_spec=pltpu.PrefetchScalarGridSpec(
            num_scalar_prefetch=0,
            grid=(num_tiles,),
            in_specs=[pl.BlockSpec((tile_r, width), lambda i: (i, 0))],
            out_specs=pl.BlockSpec((1, 1), lambda i: (i, 0),
                                   memory_space=pltpu.SMEM),
        ),
        compiler_params=pltpu.CompilerParams(
            dimension_semantics=("parallel",),              # tiles independent
            vmem_limit_bytes=_VMEM_LIMIT_BYTES,
        ),
    )(x2)
    # mean over original leading dims == (sum over all (row, chunk)) / rows
    return jnp.sum(partials) / jnp.float32(rows)


# ----------------------------- backward kernel -----------------------------

def _safn_bwd_kernel(scale_ref, x_ref, dx_ref, *, chunk_dim, n_chunks, block_rows):
    scale = scale_ref[0, 0]                                 # g * (-2*delta/rows)
    x = x_ref[...].astype(jnp.float32)                      # (block_rows, width)
    if n_chunks == 1:
        sumsq = jnp.sum(x * x, axis=-1, keepdims=True)
        inv = jnp.where(sumsq > 0.0, 1.0 / jnp.sqrt(sumsq), 0.0)
        dx = x * (scale * inv)
    else:
        width = n_chunks * chunk_dim
        lane = jax.lax.broadcasted_iota(jnp.int32, (block_rows, width), 1)
        inv_full = jnp.zeros((block_rows, width), jnp.float32)
        for c in range(n_chunks):                           # static, small
            chunk = x[:, c * chunk_dim:(c + 1) * chunk_dim]
            sumsq = jnp.sum(chunk * chunk, axis=-1, keepdims=True)
            inv_c = jnp.where(sumsq > 0.0, 1.0 / jnp.sqrt(sumsq), 0.0)
            in_c = (lane >= c * chunk_dim) & (lane < (c + 1) * chunk_dim)
            inv_full = jnp.where(in_c, inv_c, inv_full)
        dx = x * (scale * inv_full)
    dx_ref[...] = dx.astype(dx_ref.dtype)


def _safn_grad(x, input_dim, delta, block_rows, g):
    rows, n_rows, width, k_chunks, tile_r, num_tiles = _plan(x, input_dim, block_rows)
    x2 = jnp.reshape(x, (n_rows, width))
    scale = jnp.reshape(
        jnp.asarray(g, jnp.float32) * jnp.float32(-2.0 * float(delta) / float(rows)),
        (1, 1))
    kernel = functools.partial(
        _safn_bwd_kernel, chunk_dim=input_dim, n_chunks=k_chunks,
        block_rows=tile_r)
    dx2 = pl.pallas_call(
        kernel,
        out_shape=jax.ShapeDtypeStruct((n_rows, width), x.dtype),
        grid_spec=pltpu.PrefetchScalarGridSpec(
            num_scalar_prefetch=0,
            grid=(num_tiles,),
            in_specs=[
                pl.BlockSpec((1, 1), lambda i: (0, 0), memory_space=pltpu.SMEM),
                pl.BlockSpec((tile_r, width), lambda i: (i, 0)),
            ],
            out_specs=pl.BlockSpec((tile_r, width), lambda i: (i, 0)),
        ),
        compiler_params=pltpu.CompilerParams(
            dimension_semantics=("parallel",),
            vmem_limit_bytes=_VMEM_LIMIT_BYTES,
        ),
    )(scale, x2)
    return jnp.reshape(dx2, x.shape)


# ----------------------------- public API (custom VJP) ---------------------

@functools.partial(jax.custom_vjp, nondiff_argnums=(1, 2, 3))
def _safn_loss(x, input_dim, delta, block_rows):
    return _safn_forward(x, input_dim, delta, block_rows)


def _safn_loss_fwd(x, input_dim, delta, block_rows):
    return _safn_forward(x, input_dim, delta, block_rows), x


def _safn_loss_bwd(input_dim, delta, block_rows, x, g):
    return (_safn_grad(x, input_dim, delta, block_rows, g),)


_safn_loss.defvjp(_safn_loss_fwd, _safn_loss_bwd)


def safn_loss(x, input_dim, delta, block_rows=None):
    """Pallas implementation of SAFNLoss.forward (scalar f32, differentiable)."""
    return _safn_loss(x, input_dim, delta, block_rows)


# ----------------------------- pure-JAX reference --------------------------

def _reference_safn_loss(x, input_dim, delta):
    feat = x.shape[-1]
    n_chunks = feat // input_dim
    loss = jnp.float32(0.0)
    for c in range(n_chunks):
        chunk = x[..., c * input_dim:(c + 1) * input_dim].astype(jnp.float32)
        norm = jnp.sqrt(jnp.sum(chunk * chunk, axis=-1))
        radius = jax.lax.stop_gradient(norm) + delta
        loss = loss + jnp.mean((norm - radius) ** 2)
    return loss


if __name__ == "__main__":
    key = jax.random.PRNGKey(0)
    k1, k2 = jax.random.split(key)
    DELTA = 1.0

    # ---- Case 1: lane-aligned chunks (input_dim = 128), f32, fwd + grad ----
    INPUT_DIM = 128
    x1 = jax.random.normal(k1, (2, 4, 8, 3 * INPUT_DIM), dtype=jnp.float32)

    loss1 = jax.block_until_ready(safn_loss(x1, INPUT_DIM, DELTA))
    ref1 = _reference_safn_loss(x1, INPUT_DIM, DELTA)
    assert jnp.allclose(loss1, ref1, rtol=1e-5, atol=1e-5), (loss1, ref1)

    g1 = jax.block_until_ready(jax.grad(safn_loss)(x1, INPUT_DIM, DELTA))
    gref1 = jax.grad(_reference_safn_loss)(x1, INPUT_DIM, DELTA)
    assert jnp.allclose(g1, gref1, rtol=1e-4, atol=1e-6), "grad mismatch (case 1)"

    # ---- Case 2: force several row tiles + ragged last tile (masking) -----
    loss1b = jax.block_until_ready(safn_loss(x1, INPUT_DIM, DELTA, 80))
    assert jnp.allclose(loss1b, ref1, rtol=1e-5, atol=1e-5), (loss1b, ref1)
    g1b = jax.block_until_ready(
        jax.grad(lambda v: safn_loss(v, INPUT_DIM, DELTA, 80))(x1))
    assert jnp.allclose(g1b, gref1, rtol=1e-4, atol=1e-6), "grad mismatch (case 2)"

    # ---- Case 3: bf16 input stays bf16 on the wire (f32 math in-kernel) ----
    x1_bf16 = x1.astype(jnp.bfloat16)
    loss_bf16 = jax.block_until_ready(safn_loss(x1_bf16, INPUT_DIM, DELTA))
    ref_bf16 = _reference_safn_loss(x1_bf16, INPUT_DIM, DELTA)
    assert jnp.allclose(loss_bf16, ref_bf16, rtol=1e-3, atol=1e-3)

    # ---- Case 4: input_dim not a multiple of 128 (lane-dense fallback) ----
    INPUT_DIM2 = 32
    x2 = jax.random.normal(k2, (2, 8, 3 * INPUT_DIM2), dtype=jnp.float32)
    loss2 = jax.block_until_ready(safn_loss(x2, INPUT_DIM2, DELTA))
    ref2 = _reference_safn_loss(x2, INPUT_DIM2, DELTA)
    assert jnp.allclose(loss2, ref2, rtol=1e-5, atol=1e-5), (loss2, ref2)
    g2 = jax.block_until_ready(jax.grad(safn_loss)(x2, INPUT_DIM2, DELTA))
    gref2 = jax.grad(_reference_safn_loss)(x2, INPUT_DIM2, DELTA)
    assert jnp.allclose(g2, gref2, rtol=1e-4, atol=1e-6), "grad mismatch (case 4)"

    print("KERNEL_OK")
</pallas_src>

<mosaic_0001>
module attributes {stable_mosaic.version = 11 : i64} {
  func.func @_safn_fwd_kernel(%arg0: i32, %arg1: memref<192x128xf32, #tpu.memory_space<vmem>>, %arg2: memref<1x1xf32, #tpu.memory_space<smem>>) attributes {dimension_semantics = [#tpu.dimension_semantics<parallel>], iteration_bounds = array<i64: 1>, scalar_prefetch = 0 : i64, scratch_operands = 0 : i64, tpu.core_type = #tpu.core_type<tc>, window_params = [{transform_indices = @transform_0, window_bounds = array<i64: 192, 128>}, {transform_indices = @transform_1, window_bounds = array<i64: 1, 1>}]} {
    %c0 = arith.constant 0 : index
    %c0_0 = arith.constant 0 : index
    %0 = vector.load %arg1[%c0, %c0_0] : memref<192x128xf32, #tpu.memory_space<vmem>>, vector<192x128xf32>
    %cst = arith.constant 0.000000e+00 : f32
    %1 = vector.broadcast %cst : f32 to vector<192x1xf32>
    %2 = arith.mulf %0, %0 : vector<192x128xf32>
    %cst_1 = arith.constant dense<0.000000e+00> : vector<192xf32>
    %3 = vector.multi_reduction <add>, %2, %cst_1 [1] : vector<192x128xf32> to vector<192xf32>
    %4 = vector.shape_cast %3 : vector<192xf32> to vector<192x1xf32>
    %5 = math.sqrt %4 : vector<192x1xf32>
    %cst_2 = arith.constant 1.000000e+00 : f32
    %6 = vector.broadcast %cst_2 : f32 to vector<192x1xf32>
    %7 = arith.addf %5, %6 : vector<192x1xf32>
    %8 = arith.subf %5, %7 : vector<192x1xf32>
    %9 = arith.mulf %8, %8 : vector<192x1xf32>
    %10 = arith.addf %1, %9 : vector<192x1xf32>
    %c192_i32 = arith.constant 192 : i32
    %11 = arith.muli %arg0, %c192_i32 : i32
    %12 = tpu.iota {dimensions = array<i32: 0>} : vector<192x1xi32>
    %13 = vector.broadcast %11 : i32 to vector<192x1xi32>
    %14 = arith.addi %13, %12 : vector<192x1xi32>
    %c192_i32_3 = arith.constant 192 : i32
    %15 = vector.broadcast %c192_i32_3 : i32 to vector<192x1xi32>
    %16 = arith.cmpi slt, %14, %15 : vector<192x1xi32>
    %cst_4 = arith.constant 0.000000e+00 : f32
    %17 = vector.broadcast %cst_4 : f32 to vector<192x1xf32>
    %18 = arith.select %16, %10, %17 : vector<192x1xi1>, vector<192x1xf32>
    %19 = vector.shape_cast %18 : vector<192x1xf32> to vector<1x192x1xf32>
    %cst_5 = arith.constant dense<0.000000e+00> : vector<1xf32>
    %20 = vector.multi_reduction <add>, %19, %cst_5 [1, 2] : vector<1x192x1xf32> to vector<1xf32>
    %21 = vector.shape_cast %20 : vector<1xf32> to vector<1x1x1xf32>
    %22 = vector.extract %21[0, 0, 0] : f32 from vector<1x1x1xf32>
    %c0_6 = arith.constant 0 : index
    %c0_7 = arith.constant 0 : index
    %23 = memref.load %arg2[%c0_6, %c0_7] : memref<1x1xf32, #tpu.memory_space<smem>>
    memref.store %22, %arg2[%c0_6, %c0_7] : memref<1x1xf32, #tpu.memory_space<smem>>
    return
  }
  func.func @transform_0(%arg0: i32) -> (i32, i32) {
    %c0_i32 = arith.constant 0 : i32
    %c0_i32_0 = arith.constant 0 : i32
    return %arg0, %c0_i32 : i32, i32
  }
  func.func @transform_1(%arg0: i32) -> (i32, i32) {
    %c0_i32 = arith.constant 0 : i32
    %c0_i32_0 = arith.constant 0 : i32
    return %arg0, %c0_i32 : i32, i32
  }
}

</mosaic_0001>

<llo_original>
// kernel: tpu_custom_call.1
$region0: #{tpu_custom_call.1}
  #allocation0 [shape = 'u32[]', space=smem, size = 0x4, offset = 0x4, fixed_abs, tag = 'smem constant byte address 0x4 - core index']
  #allocation1 [shape = 'u32[72,128]{1,0:T(1,128)}', space=vmem, size = 0x9000, scoped, tag = 'internal scratch']
  %s0 = inlined_call_operand.hbm [shape: f32[192,128], index: 0, kind: input, shape index: {}]
  %s1 = inlined_call_operand.hbm [shape: f32[1,1], index: 1, kind: output, shape index: {}]
  %s2 = sld [smem:[#allocation0]]
  $region18: #{tpu_custom_call.1} parent=0
    _
  %s4 = ssub.s32 1, %s2
  %s5 = scalar_select 0, %s4, %s2
  $region1: #{tpu_custom_call.1} parent=0
    #allocation2 [shape = 'u8[98304]{0}', space=vmem, size = 0x18000, scoped, tag = 'input window, operand 0, single buffered']
    #allocation3 [shape = 's32[1]{0}', space=sflag, size = 0x4, scoped, tag = 'scoped memory for tpu_custom_call.1']
    #allocation4 [shape = 's32[1]{0}', space=sflag, size = 0x4, scoped, tag = 'scoped memory for tpu_custom_call.1']
    #allocation5 [shape = 'u8[512]{0}', space=smem, size = 0x200, scoped, tag = 'output window, operand 0, single buffered']
    %6 = vsyncpa [#allocation3], 0
    %7 = vsyncpa [#allocation4], 0
    // Predicated region
    $region2: #{tpu_custom_call.1} parent=1 // pred_check
      _
    $region3: #{tpu_custom_call.1} parent=1 // pred_check_branch
      %9 = sbr.rel (0) target = $region5
    $region4: #{tpu_custom_call.1} parent=1 // pred_region
      %11 = vsyncadd [#allocation3], 0
      %s12 = sshll.u32 %s0, 4
      %s13 = int_to_ptr.hbm [resolvable:$true] %s12
      %s14 = sshll.u32 [#allocation2], 4
      %s15 = int_to_ptr.vmem [resolvable:$true] %s14
      %20 = dma.hbm_to_vmem [thread:$0]  %s13, 3072, %s15, [#allocation3], 128, 128, 8
    $region5: #{tpu_custom_call.1} parent=1 // pred_fallthru
      _
    // Predicated region
    $region6: #{tpu_custom_call.1} parent=1 // pred_check
      _
    $region7: #{tpu_custom_call.1} parent=1 // pred_check_branch
      %22 = sbr.rel (0) target = $region9
    $region8: #{tpu_custom_call.1} parent=1 // pred_region
      %24 = dma.done [#allocation3], 3072
    $region9: #{tpu_custom_call.1} parent=1 // pred_fallthru
      _
    %v25 = vld [vmem:[#allocation2] sm:$0xff]
    %v26 = vld [vmem:[#allocation2 + $0x8] sm:$0xff]
    %v27 = vld [vmem:[#allocation2 + $0x10] sm:$0xff]
    %v28 = vld [vmem:[#allocation2 + $0x18] sm:$0xff]
    %v29 = vld [vmem:[#allocation2 + $0x20] sm:$0xff]
    %v30 = vld [vmem:[#allocation2 + $0x28] sm:$0xff]
    %v31 = vld [vmem:[#allocation2 + $0x30] sm:$0xff]
    %v32 = vld [vmem:[#allocation2 + $0x38] sm:$0xff]
    %v33 = vld [vmem:[#allocation2 + $0x40] sm:$0xff]
    %v34 = vld [vmem:[#allocation2 + $0x48] sm:$0xff]
    %v35 = vld [vmem:[#allocation2 + $0x50] sm:$0xff]
    %v36 = vld [vmem:[#allocation2 + $0x58] sm:$0xff]
    %v37 = vld [vmem:[#allocation2 + $0x60] sm:$0xff]
    %v38 = vld [vmem:[#allocation2 + $0x68] sm:$0xff]
    %v39 = vld [vmem:[#allocation2 + $0x70] sm:$0xff]
    %v40 = vld [vmem:[#allocation2 + $0x78] sm:$0xff]
    %v41 = vld [vmem:[#allocation2 + $0x80] sm:$0xff]
    %v42 = vld [vmem:[#allocation2 + $0x88] sm:$0xff]
    %v43 = vld [vmem:[#allocation2 + $0x90] sm:$0xff]
    %v44 = vld [vmem:[#allocation2 + $0x98] sm:$0xff]
    %v45 = vld [vmem:[#allocation2 + $0xa0] sm:$0xff]
    %v46 = vld [vmem:[#allocation2 + $0xa8] sm:$0xff]
    %v47 = vld [vmem:[#allocation2 + $0xb0] sm:$0xff]
    %v48 = vld [vmem:[#allocation2 + $0xb8] sm:$0xff]
    %v49 = vmul.f32 %v25, %v25
    %v50 = vmul.f32 %v26, %v26
    %v51 = vmul.f32 %v27, %v27
    %v52 = vmul.f32 %v28, %v28
    %v53 = vmul.f32 %v29, %v29
    %v54 = vmul.f32 %v30, %v30
    %v55 = vmul.f32 %v31, %v31
    %v56 = vmul.f32 %v32, %v32
    %v57 = vmul.f32 %v33, %v33
    %v58 = vmul.f32 %v34, %v34
    %v59 = vmul.f32 %v35, %v35
    %v60 = vmul.f32 %v36, %v36
    %v61 = vmul.f32 %v37, %v37
    %v62 = vmul.f32 %v38, %v38
    %v63 = vmul.f32 %v39, %v39
    %v64 = vmul.f32 %v40, %v40
    %v65 = vmul.f32 %v41, %v41
    %v66 = vmul.f32 %v42, %v42
    %v67 = vmul.f32 %v43, %v43
    %v68 = vmul.f32 %v44, %v44
    %v69 = vmul.f32 %v45, %v45
    %v70 = vmul.f32 %v46, %v46
    %v71 = vmul.f32 %v47, %v47
    %v72 = vmul.f32 %v48, %v48
    %73 = vadd.xlane.f32.xlu0 %v49
    %v74 = vpop.xlane.xlu0 %73
    %75 = vadd.xlane.f32.xlu0 %v50
    %v76 = vpop.xlane.xlu0 %75
    %77 = vadd.xlane.f32.xlu0 %v51
    %v78 = vpop.xlane.xlu0 %77
    %79 = vadd.xlane.f32.xlu0 %v52
    %v80 = vpop.xlane.xlu0 %79
    %81 = vadd.xlane.f32.xlu0 %v53
    %v82 = vpop.xlane.xlu0 %81
    %83 = vadd.xlane.f32.xlu0 %v54
    %v84 = vpop.xlane.xlu0 %83
    %85 = vadd.xlane.f32.xlu0 %v55
    %v86 = vpop.xlane.xlu0 %85
    %87 = vadd.xlane.f32.xlu0 %v56
    %v88 = vpop.xlane.xlu0 %87
    %89 = vadd.xlane.f32.xlu0 %v57
    %v90 = vpop.xlane.xlu0 %89
    %91 = vadd.xlane.f32.xlu0 %v58
    %v92 = vpop.xlane.xlu0 %91
    %93 = vadd.xlane.f32.xlu0 %v59
    %v94 = vpop.xlane.xlu0 %93
    %95 = vadd.xlane.f32.xlu0 %v60
    %v96 = vpop.xlane.xlu0 %95
    %97 = vadd.xlane.f32.xlu0 %v61
    %v98 = vpop.xlane.xlu0 %97
    %99 = vadd.xlane.f32.xlu0 %v62
    %v100 = vpop.xlane.xlu0 %99
    %101 = vadd.xlane.f32.xlu0 %v63
    %v102 = vpop.xlane.xlu0 %101
    %103 = vadd.xlane.f32.xlu0 %v64
    %v104 = vpop.xlane.xlu0 %103
    %105 = vadd.xlane.f32.xlu0 %v65
    %v106 = vpop.xlane.xlu0 %105
    %107 = vadd.xlane.f32.xlu0 %v66
    %v108 = vpop.xlane.xlu0 %107
    %109 = vadd.xlane.f32.xlu0 %v67
    %v110 = vpop.xlane.xlu0 %109
    %111 = vadd.xlane.f32.xlu0 %v68
    %v112 = vpop.xlane.xlu0 %111
    %113 = vadd.xlane.f32.xlu0 %v69
    %v114 = vpop.xlane.xlu0 %113
    %115 = vadd.xlane.f32.xlu0 %v70
    %v116 = vpop.xlane.xlu0 %115
    %117 = vadd.xlane.f32.xlu0 %v71
    %v118 = vpop.xlane.xlu0 %117
    %119 = vadd.xlane.f32.xlu0 %v72
    %v120 = vpop.xlane.xlu0 %119
    %v121 = vrsqrt.pop %v74
    %v122 = vmul.f32 %v121, %v74
    %v123 = vmul.f32 %v122, %v121
    %v124 = vmul.f32 0.5, %v123
    %v125 = vsub.f32 1.5, %v124
    %v126 = vmul.f32 %v121, %v125
    %v127 = vmul.f32 %v74, %v126
    %vm128 = vcmp.eq.f32.partialorder %v74, inf
    %v129 = vsel %vm128, %v74, %v127
    %vm130 = vcmp.eq.f32.partialorder %v74, 0.0
    %v131 = vand.u32 %v74, 2147483648
    %v132 = vsel %vm130, %v131, %v129
    %v133 = vrsqrt.pop %v76
    %v134 = vmul.f32 %v133, %v76
    %v135 = vmul.f32 %v134, %v133
    %v136 = vmul.f32 0.5, %v135
    %v137 = vsub.f32 1.5, %v136
    %v138 = vmul.f32 %v133, %v137
    %v139 = vmul.f32 %v76, %v138
    %vm140 = vcmp.eq.f32.partialorder %v76, inf
    %v141 = vsel %vm140, %v76, %v139
    %vm142 = vcmp.eq.f32.partialorder %v76, 0.0
    %v143 = vand.u32 %v76, 2147483648
    %v144 = vsel %vm142, %v143, %v141
    %v145 = vrsqrt.pop %v78
    %v146 = vmul.f32 %v145, %v78
    %v147 = vmul.f32 %v146, %v145
    %v148 = vmul.f32 0.5, %v147
    %v149 = vsub.f32 1.5, %v148
    %v150 = vmul.f32 %v145, %v149
    %v151 = vmul.f32 %v78, %v150
    %vm152 = vcmp.eq.f32.partialorder %v78, inf
    %v153 = vsel %vm152, %v78, %v151
    %vm154 = vcmp.eq.f32.partialorder %v78, 0.0
    %v155 = vand.u32 %v78, 2147483648
    %v156 = vsel %vm154, %v155, %v153
    %v157 = vrsqrt.pop %v80
    %v158 = vmul.f32 %v157, %v80
    %v159 = vmul.f32 %v158, %v157
    %v160 = vmul.f32 0.5, %v159
    %v161 = vsub.f32 1.5, %v160
    %v162 = vmul.f32 %v157, %v161
    %v163 = vmul.f32 %v80, %v162
    %vm164 = vcmp.eq.f32.partialorder %v80, inf
    %v165 = vsel %vm164, %v80, %v163
    %vm166 = vcmp.eq.f32.partialorder %v80, 0.0
    %v167 = vand.u32 %v80, 2147483648
    %v168 = vsel %vm166, %v167, %v165
    %v169 = vrsqrt.pop %v82
    %v170 = vmul.f32 %v169, %v82
    %v171 = vmul.f32 %v170, %v169
    %v172 = vmul.f32 0.5, %v171
    %v173 = vsub.f32 1.5, %v172
    %v174 = vmul.f32 %v169, %v173
    %v175 = vmul.f32 %v82, %v174
    %vm176 = vcmp.eq.f32.partialorder %v82, inf
    %v177 = vsel %vm176, %v82, %v175
    %vm178 = vcmp.eq.f32.partialorder %v82, 0.0
    %v179 = vand.u32 %v82, 2147483648
    %v180 = vsel %vm178, %v179, %v177
    %v181 = vrsqrt.pop %v84
    %v182 = vmul.f32 %v181, %v84
    %v183 = vmul.f32 %v182, %v181
    %v184 = vmul.f32 0.5, %v183
    %v185 = vsub.f32 1.5, %v184
    %v186 = vmul.f32 %v181, %v185
    %v187 = vmul.f32 %v84, %v186
    %vm188 = vcmp.eq.f32.partialorder %v84, inf
    %v189 = vsel %vm188, %v84, %v187
    %vm190 = vcmp.eq.f32.partialorder %v84, 0.0
    %v191 = vand.u32 %v84, 2147483648
    %v192 = vsel %vm190, %v191, %v189
    %v193 = vrsqrt.pop %v86
    %v194 = vmul.f32 %v193, %v86
    %v195 = vmul.f32 %v194, %v193
    %v196 = vmul.f32 0.5, %v195
    %v197 = vsub.f32 1.5, %v196
    %v198 = vmul.f32 %v193, %v197
    %v199 = vmul.f32 %v86, %v198
    %vm200 = vcmp.eq.f32.partialorder %v86, inf
    %v201 = vsel %vm200, %v86, %v199
    %vm202 = vcmp.eq.f32.partialorder %v86, 0.0
    %v203 = vand.u32 %v86, 2147483648
    %v204 = vsel %vm202, %v203, %v201
    %v205 = vrsqrt.pop %v88
    %v206 = vmul.f32 %v205, %v88
    %v207 = vmul.f32 %v206, %v205
    %v208 = vmul.f32 0.5, %v207
    %v209 = vsub.f32 1.5, %v208
    %v210 = vmul.f32 %v205, %v209
    %v211 = vmul.f32 %v88, %v210
    %vm212 = vcmp.eq.f32.partialorder %v88, inf
    %v213 = vsel %vm212, %v88, %v211
    %vm214 = vcmp.eq.f32.partialorder %v88, 0.0
    %v215 = vand.u32 %v88, 2147483648
    %v216 = vsel %vm214, %v215, %v213
    %v217 = vrsqrt.pop %v90
    %v218 = vmul.f32 %v217, %v90
    %v219 = vmul.f32 %v218, %v217
    %v220 = vmul.f32 0.5, %v219
    %v221 = vsub.f32 1.5, %v220
    %v222 = vmul.f32 %v217, %v221
    %v223 = vmul.f32 %v90, %v222
    %vm224 = vcmp.eq.f32.partialorder %v90, inf
    %v225 = vsel %vm224, %v90, %v223
    %vm226 = vcmp.eq.f32.partialorder %v90, 0.0
    %v227 = vand.u32 %v90, 2147483648
    %v228 = vsel %vm226, %v227, %v225
    %v229 = vrsqrt.pop %v92
    %v230 = vmul.f32 %v229, %v92
    %v231 = vmul.f32 %v230, %v229
    %v232 = vmul.f32 0.5, %v231
    %v233 = vsub.f32 1.5, %v232
    %v234 = vmul.f32 %v229, %v233
    %v235 = vmul.f32 %v92, %v234
    %vm236 = vcmp.eq.f32.partialorder %v92, inf
    %v237 = vsel %vm236, %v92, %v235
    %vm238 = vcmp.eq.f32.partialorder %v92, 0.0
    %v239 = vand.u32 %v92, 2147483648
    %v240 = vsel %vm238, %v239, %v237
    %v241 = vrsqrt.pop %v94
    %v242 = vmul.f32 %v241, %v94
    %v243 = vmul.f32 %v242, %v241
    %v244 = vmul.f32 0.5, %v243
    %v245 = vsub.f32 1.5, %v244
    %v246 = vmul.f32 %v241, %v245
    %v247 = vmul.f32 %v94, %v246
    %vm248 = vcmp.eq.f32.partialorder %v94, inf
    %v249 = vsel %vm248, %v94, %v247
    %vm250 = vcmp.eq.f32.partialorder %v94, 0.0
    %v251 = vand.u32 %v94, 2147483648
    %v252 = vsel %vm250, %v251, %v249
    %v253 = vrsqrt.pop %v96
    %v254 = vmul.f32 %v253, %v96
    %v255 = vmul.f32 %v254, %v253
    %v256 = vmul.f32 0.5, %v255
    %v257 = vsub.f32 1.5, %v256
    %v258 = vmul.f32 %v253, %v257
    %v259 = vmul.f32 %v96, %v258
    %vm260 = vcmp.eq.f32.partialorder %v96, inf
    %v261 = vsel %vm260, %v96, %v259
    %vm262 = vcmp.eq.f32.partialorder %v96, 0.0
    %v263 = vand.u32 %v96, 2147483648
    %v264 = vsel %vm262, %v263, %v261
    %v265 = vrsqrt.pop %v98
    %v266 = vmul.f32 %v265, %v98
    %v267 = vmul.f32 %v266, %v265
    %v268 = vmul.f32 0.5, %v267
    %v269 = vsub.f32 1.5, %v268
    %v270 = vmul.f32 %v265, %v269
    %v271 = vmul.f32 %v98, %v270
    %vm272 = vcmp.eq.f32.partialorder %v98, inf
    %v273 = vsel %vm272, %v98, %v271
    %vm274 = vcmp.eq.f32.partialorder %v98, 0.0
    %v275 = vand.u32 %v98, 2147483648
    %v276 = vsel %vm274, %v275, %v273
    %v277 = vrsqrt.pop %v100
    %v278 = vmul.f32 %v277, %v100
    %v279 = vmul.f32 %v278, %v277
    %v280 = vmul.f32 0.5, %v279
    %v281 = vsub.f32 1.5, %v280
    %v282 = vmul.f32 %v277, %v281
    %v283 = vmul.f32 %v100, %v282
    %vm284 = vcmp.eq.f32.partialorder %v100, inf
    %v285 = vsel %vm284, %v100, %v283
    %vm286 = vcmp.eq.f32.partialorder %v100, 0.0
    %v287 = vand.u32 %v100, 2147483648
    %v288 = vsel %vm286, %v287, %v285
    %v289 = vrsqrt.pop %v102
    %v290 = vmul.f32 %v289, %v102
    %v291 = vmul.f32 %v290, %v289
    %v292 = vmul.f32 0.5, %v291
    %v293 = vsub.f32 1.5, %v292
    %v294 = vmul.f32 %v289, %v293
    %v295 = vmul.f32 %v102, %v294
    %vm296 = vcmp.eq.f32.partialorder %v102, inf
    %v297 = vsel %vm296, %v102, %v295
    %vm298 = vcmp.eq.f32.partialorder %v102, 0.0
    %v299 = vand.u32 %v102, 2147483648
    %v300 = vsel %vm298, %v299, %v297
    %v301 = vrsqrt.pop %v104
    %v302 = vmul.f32 %v301, %v104
    %v303 = vmul.f32 %v302, %v301
    %v304 = vmul.f32 0.5, %v303
    %v305 = vsub.f32 1.5, %v304
    %v306 = vmul.f32 %v301, %v305
    %v307 = vmul.f32 %v104, %v306
    %vm308 = vcmp.eq.f32.partialorder %v104, inf
    %v309 = vsel %vm308, %v104, %v307
    %vm310 = vcmp.eq.f32.partialorder %v104, 0.0
    %v311 = vand.u32 %v104, 2147483648
    %v312 = vsel %vm310, %v311, %v309
    %v313 = vrsqrt.pop %v106
    %v314 = vmul.f32 %v313, %v106
    %v315 = vmul.f32 %v314, %v313
    %v316 = vmul.f32 0.5, %v315
    %v317 = vsub.f32 1.5, %v316
    %v318 = vmul.f32 %v313, %v317
    %v319 = vmul.f32 %v106, %v318
    %vm320 = vcmp.eq.f32.partialorder %v106, inf
    %v321 = vsel %vm320, %v106, %v319
    %vm322 = vcmp.eq.f32.partialorder %v106, 0.0
    %v323 = vand.u32 %v106, 2147483648
    %v324 = vsel %vm322, %v323, %v321
    %v325 = vrsqrt.pop %v108
    %v326 = vmul.f32 %v325, %v108
    %v327 = vmul.f32 %v326, %v325
    %v328 = vmul.f32 0.5, %v327
    %v329 = vsub.f32 1.5, %v328
    %v330 = vmul.f32 %v325, %v329
    %v331 = vmul.f32 %v108, %v330
    %vm332 = vcmp.eq.f32.partialorder %v108, inf
    %v333 = vsel %vm332, %v108, %v331
    %vm334 = vcmp.eq.f32.partialorder %v108, 0.0
    %v335 = vand.u32 %v108, 2147483648
    %v336 = vsel %vm334, %v335, %v333
    %v337 = vrsqrt.pop %v110
    %v338 = vmul.f32 %v337, %v110
    %v339 = vmul.f32 %v338, %v337
    %v340 = vmul.f32 0.5, %v339
    %v341 = vsub.f32 1.5, %v340
    %v342 = vmul.f32 %v337, %v341
    %v343 = vmul.f32 %v110, %v342
    %vm344 = vcmp.eq.f32.partialorder %v110, inf
    %v345 = vsel %vm344, %v110, %v343
    %vm346 = vcmp.eq.f32.partialorder %v110, 0.0
    %v347 = vand.u32 %v110, 2147483648
    %v348 = vsel %vm346, %v347, %v345
    %v349 = vrsqrt.pop %v112
    %v350 = vmul.f32 %v349, %v112
    %v351 = vmul.f32 %v350, %v349
    %v352 = vmul.f32 0.5, %v351
    %v353 = vsub.f32 1.5, %v352
    %v354 = vmul.f32 %v349, %v353
    %v355 = vmul.f32 %v112, %v354
    %vm356 = vcmp.eq.f32.partialorder %v112, inf
    %v357 = vsel %vm356, %v112, %v355
    %vm358 = vcmp.eq.f32.partialorder %v112, 0.0
    %v359 = vand.u32 %v112, 2147483648
    %v360 = vsel %vm358, %v359, %v357
    %v361 = vrsqrt.pop %v114
    %v362 = vmul.f32 %v361, %v114
    %v363 = vmul.f32 %v362, %v361
    %v364 = vmul.f32 0.5, %v363
    %v365 = vsub.f32 1.5, %v364
    %v366 = vmul.f32 %v361, %v365
    %v367 = vmul.f32 %v114, %v366
    %vm368 = vcmp.eq.f32.partialorder %v114, inf
    %v369 = vsel %vm368, %v114, %v367
    %vm370 = vcmp.eq.f32.partialorder %v114, 0.0
    %v371 = vand.u32 %v114, 2147483648
    %v372 = vsel %vm370, %v371, %v369
    %v373 = vrsqrt.pop %v116
    %v374 = vmul.f32 %v373, %v116
    %v375 = vmul.f32 %v374, %v373
    %v376 = vmul.f32 0.5, %v375
    %v377 = vsub.f32 1.5, %v376
    %v378 = vmul.f32 %v373, %v377
    %v379 = vmul.f32 %v116, %v378
    %vm380 = vcmp.eq.f32.partialorder %v116, inf
    %v381 = vsel %vm380, %v116, %v379
    %vm382 = vcmp.eq.f32.partialorder %v116, 0.0
    %v383 = vand.u32 %v116, 2147483648
    %v384 = vsel %vm382, %v383, %v381
    %v385 = vrsqrt.pop %v118
    %v386 = vmul.f32 %v385, %v118
    %v387 = vmul.f32 %v386, %v385
    %v388 = vmul.f32 0.5, %v387
    %v389 = vsub.f32 1.5, %v388
    %v390 = vmul.f32 %v385, %v389
    %v391 = vmul.f32 %v118, %v390
    %vm392 = vcmp.eq.f32.partialorder %v118, inf
    %v393 = vsel %vm392, %v118, %v391
    %vm394 = vcmp.eq.f32.partialorder %v118, 0.0
    %v395 = vand.u32 %v118, 2147483648
    %v396 = vsel %vm394, %v395, %v393
    %v397 = vrsqrt.pop %v120
    %v398 = vmul.f32 %v397, %v120
    %v399 = vmul.f32 %v398, %v397
    %v400 = vmul.f32 0.5, %v399
    %v401 = vsub.f32 1.5, %v400
    %v402 = vmul.f32 %v397, %v401
    %v403 = vmul.f32 %v120, %v402
    %vm404 = vcmp.eq.f32.partialorder %v120, inf
    %v405 = vsel %vm404, %v120, %v403
    %vm406 = vcmp.eq.f32.partialorder %v120, 0.0
    %v407 = vand.u32 %v120, 2147483648
    %v408 = vsel %vm406, %v407, %v405
    %v409 = vadd.f32 %v132, 1.0
    %v410 = vadd.f32 %v144, 1.0
    %v411 = vadd.f32 %v156, 1.0
    %v412 = vadd.f32 %v168, 1.0
    %v413 = vadd.f32 %v180, 1.0
    %v414 = vadd.f32 %v192, 1.0
    %v415 = vadd.f32 %v204, 1.0
    %v416 = vadd.f32 %v216, 1.0
    %v417 = vadd.f32 %v228, 1.0
    %v418 = vadd.f32 %v240, 1.0
    %v419 = vadd.f32 %v252, 1.0
    %v420 = vadd.f32 %v264, 1.0
    %v421 = vadd.f32 %v276, 1.0
    %v422 = vadd.f32 %v288, 1.0
    %v423 = vadd.f32 %v300, 1.0
    %v424 = vadd.f32 %v312, 1.0
    %v425 = vadd.f32 %v324, 1.0
    %v426 = vadd.f32 %v336, 1.0
    %v427 = vadd.f32 %v348, 1.0
    %v428 = vadd.f32 %v360, 1.0
    %v429 = vadd.f32 %v372, 1.0
    %v430 = vadd.f32 %v384, 1.0
    %v431 = vadd.f32 %v396, 1.0
    %v432 = vadd.f32 %v408, 1.0
    %v433 = vsub.f32 %v132, %v409
    %v434 = vsub.f32 %v144, %v410
    %v435 = vsub.f32 %v156, %v411
    %v436 = vsub.f32 %v168, %v412
    %v437 = vsub.f32 %v180, %v413
    %v438 = vsub.f32 %v192, %v414
    %v439 = vsub.f32 %v204, %v415
    %v440 = vsub.f32 %v216, %v416
    %v441 = vsub.f32 %v228, %v417
    %v442 = vsub.f32 %v240, %v418
    %v443 = vsub.f32 %v252, %v419
    %v444 = vsub.f32 %v264, %v420
    %v445 = vsub.f32 %v276, %v421
    %v446 = vsub.f32 %v288, %v422
    %v447 = vsub.f32 %v300, %v423
    %v448 = vsub.f32 %v312, %v424
    %v449 = vsub.f32 %v324, %v425
    %v450 = vsub.f32 %v336, %v426
    %v451 = vsub.f32 %v348, %v427
    %v452 = vsub.f32 %v360, %v428
    %v453 = vsub.f32 %v372, %v429
    %v454 = vsub.f32 %v384, %v430
    %v455 = vsub.f32 %v396, %v431
    %v456 = vsub.f32 %v408, %v432
    %v457 = vmul.f32 %v433, %v433
    %v458 = vmul.f32 %v434, %v434
    %v459 = vmul.f32 %v435, %v435
    %v460 = vmul.f32 %v436, %v436
    %v461 = vmul.f32 %v437, %v437
    %v462 = vmul.f32 %v438, %v438
    %v463 = vmul.f32 %v439, %v439
    %v464 = vmul.f32 %v440, %v440
    %v465 = vmul.f32 %v441, %v441
    %v466 = vmul.f32 %v442, %v442
    %v467 = vmul.f32 %v443, %v443
    %v468 = vmul.f32 %v444, %v444
    %v469 = vmul.f32 %v445, %v445
    %v470 = vmul.f32 %v446, %v446
    %v471 = vmul.f32 %v447, %v447
    %v472 = vmul.f32 %v448, %v448
    %v473 = vmul.f32 %v449, %v449
    %v474 = vmul.f32 %v450, %v450
    %v475 = vmul.f32 %v451, %v451
    %v476 = vmul.f32 %v452, %v452
    %v477 = vmul.f32 %v453, %v453
    %v478 = vmul.f32 %v454, %v454
    %v479 = vmul.f32 %v455, %v455
    %v480 = vmul.f32 %v456, %v456
    %v481 = vadd.f32 %v457, 0.0
    %v482 = vadd.f32 %v458, 0.0
    %v483 = vadd.f32 %v459, 0.0
    %v484 = vadd.f32 %v460, 0.0
    %v485 = vadd.f32 %v461, 0.0
    %v486 = vadd.f32 %v462, 0.0
    %v487 = vadd.f32 %v463, 0.0
    %v488 = vadd.f32 %v464, 0.0
    %v489 = vadd.f32 %v465, 0.0
    %v490 = vadd.f32 %v466, 0.0
    %v491 = vadd.f32 %v467, 0.0
    %v492 = vadd.f32 %v468, 0.0
    %v493 = vadd.f32 %v469, 0.0
    %v494 = vadd.f32 %v470, 0.0
    %v495 = vadd.f32 %v471, 0.0
    %v496 = vadd.f32 %v472, 0.0
    %v497 = vadd.f32 %v473, 0.0
    %v498 = vadd.f32 %v474, 0.0
    %v499 = vadd.f32 %v475, 0.0
    %v500 = vadd.f32 %v476, 0.0
    %v501 = vadd.f32 %v477, 0.0
    %v502 = vadd.f32 %v478, 0.0
    %v503 = vadd.f32 %v479, 0.0
    %v504 = vadd.f32 %v480, 0.0
    %s505 = smul.u32 0, 192
    %v506 = vlaneseq
    %v507 = vshrl.u32 %v506, 7
    %v508 = vadd.s32 %v507, 8
    %v509 = vadd.s32 %v507, 16
    %v510 = vadd.s32 %v507, 24
    %v511 = vadd.s32 %v507, 32
    %v512 = vadd.s32 %v507, 40
    %v513 = vadd.s32 %v507, 48
    %v514 = vadd.s32 %v507, 56
    %v515 = vadd.s32 %v507, 64
    %v516 = vadd.s32 %v507, 72
    %v517 = vadd.s32 %v507, 80
    %v518 = vadd.s32 %v507, 88
    %v519 = vadd.s32 %v507, 96
    %v520 = vadd.s32 %v507, 104
    %v521 = vadd.s32 %v507, 112
    %v522 = vadd.s32 %v507, 120
    %v523 = vadd.s32 %v507, 128
    %v524 = vadd.s32 %v507, 136
    %v525 = vadd.s32 %v507, 144
    %v526 = vadd.s32 %v507, 152
    %v527 = vadd.s32 %v507, 160
    %v528 = vadd.s32 %v507, 168
    %v529 = vadd.s32 %v507, 176
    %v530 = vadd.s32 %v507, 184
    %v531 = vstv %s505
    %v532 = vadd.s32 %v531, %v507
    %v533 = vadd.s32 %v531, %v508
    %v534 = vadd.s32 %v531, %v509
    %v535 = vadd.s32 %v531, %v510
    %v536 = vadd.s32 %v531, %v511
    %v537 = vadd.s32 %v531, %v512
    %v538 = vadd.s32 %v531, %v513
    %v539 = vadd.s32 %v531, %v514
    %v540 = vadd.s32 %v531, %v515
    %v541 = vadd.s32 %v531, %v516
    %v542 = vadd.s32 %v531, %v517
    %v543 = vadd.s32 %v531, %v518
    %v544 = vadd.s32 %v531, %v519
    %v545 = vadd.s32 %v531, %v520
    %v546 = vadd.s32 %v531, %v521
    %v547 = vadd.s32 %v531, %v522
    %v548 = vadd.s32 %v531, %v523
    %v549 = vadd.s32 %v531, %v524
    %v550 = vadd.s32 %v531, %v525
    %v551 = vadd.s32 %v531, %v526
    %v552 = vadd.s32 %v531, %v527
    %v553 = vadd.s32 %v531, %v528
    %v554 = vadd.s32 %v531, %v529
    %v555 = vadd.s32 %v531, %v530
    %vm556 = vcmp.lt.s32.totalorder %v532, 192
    %vm557 = vcmp.lt.s32.totalorder %v533, 192
    %vm558 = vcmp.lt.s32.totalorder %v534, 192
    %vm559 = vcmp.lt.s32.totalorder %v535, 192
    %vm560 = vcmp.lt.s32.totalorder %v536, 192
    %vm561 = vcmp.lt.s32.totalorder %v537, 192
    %vm562 = vcmp.lt.s32.totalorder %v538, 192
    %vm563 = vcmp.lt.s32.totalorder %v539, 192
    %vm564 = vcmp.lt.s32.totalorder %v540, 192
    %vm565 = vcmp.lt.s32.totalorder %v541, 192
    %vm566 = vcmp.lt.s32.totalorder %v542, 192
    %vm567 = vcmp.lt.s32.totalorder %v543, 192
    %vm568 = vcmp.lt.s32.totalorder %v544, 192
    %vm569 = vcmp.lt.s32.totalorder %v545, 192
    %vm570 = vcmp.lt.s32.totalorder %v546, 192
    %vm571 = vcmp.lt.s32.totalorder %v547, 192
    %vm572 = vcmp.lt.s32.totalorder %v548, 192
    %vm573 = vcmp.lt.s32.totalorder %v549, 192
    %vm574 = vcmp.lt.s32.totalorder %v550, 192
    %vm575 = vcmp.lt.s32.totalorder %v551, 192
    %vm576 = vcmp.lt.s32.totalorder %v552, 192
    %vm577 = vcmp.lt.s32.totalorder %v553, 192
    %vm578 = vcmp.lt.s32.totalorder %v554, 192
    %vm579 = vcmp.lt.s32.totalorder %v555, 192
    %v580 = vsel %vm556, %v481, 0.0
    %v581 = vsel %vm557, %v482, 0.0
    %v582 = vsel %vm558, %v483, 0.0
    %v583 = vsel %vm559, %v484, 0.0
    %v584 = vsel %vm560, %v485, 0.0
    %v585 = vsel %vm561, %v486, 0.0
    %v586 = vsel %vm562, %v487, 0.0
    %v587 = vsel %vm563, %v488, 0.0
    %v588 = vsel %vm564, %v489, 0.0
    %v589 = vsel %vm565, %v490, 0.0
    %v590 = vsel %vm566, %v491, 0.0
    %v591 = vsel %vm567, %v492, 0.0
    %v592 = vsel %vm568, %v493, 0.0
    %v593 = vsel %vm569, %v494, 0.0
    %v594 = vsel %vm570, %v495, 0.0
    %v595 = vsel %vm571, %v496, 0.0
    %v596 = vsel %vm572, %v497, 0.0
    %v597 = vsel %vm573, %v498, 0.0
    %v598 = vsel %vm574, %v499, 0.0
    %v599 = vsel %vm575, %v500, 0.0
    %v600 = vsel %vm576, %v501, 0.0
    %v601 = vsel %vm577, %v502, 0.0
    %v602 = vsel %vm578, %v503, 0.0
    %v603 = vsel %vm579, %v504, 0.0
    %vm604 = vcmask 7168
    %v605 = vsel %vm604, %v580, 0.0
    %v606 = vsel %vm604, %v581, 0.0
    %v607 = vadd.f32 %v605, %v606
    %v608 = vsel %vm604, %v582, 0.0
    %v609 = vadd.f32 %v607, %v608
    %v610 = vsel %vm604, %v583, 0.0
    %v611 = vadd.f32 %v609, %v610
    %v612 = vsel %vm604, %v584, 0.0
    %v613 = vadd.f32 %v611, %v612
    %v614 = vsel %vm604, %v585, 0.0
    %v615 = vadd.f32 %v613, %v614
    %v616 = vsel %vm604, %v586, 0.0
    %v617 = vadd.f32 %v615, %v616
    %v618 = vsel %vm604, %v587, 0.0
    %v619 = vadd.f32 %v617, %v618
    %v620 = vsel %vm604, %v588, 0.0
    %v621 = vadd.f32 %v619, %v620
    %v622 = vsel %vm604, %v589, 0.0
    %v623 = vadd.f32 %v621, %v622
    %v624 = vsel %vm604, %v590, 0.0
    %v625 = vadd.f32 %v623, %v624
    %v626 = vsel %vm604, %v591, 0.0
    %v627 = vadd.f32 %v625, %v626
    %v628 = vsel %vm604, %v592, 0.0
    %v629 = vadd.f32 %v627, %v628
    %v630 = vsel %vm604, %v593, 0.0
    %v631 = vadd.f32 %v629, %v630
    %v632 = vsel %vm604, %v594, 0.0
    %v633 = vadd.f32 %v631, %v632
    %v634 = vsel %vm604, %v595, 0.0
    %v635 = vadd.f32 %v633, %v634
    %v636 = vsel %vm604, %v596, 0.0
    %v637 = vadd.f32 %v635, %v636
    %v638 = vsel %vm604, %v597, 0.0
    %v639 = vadd.f32 %v637, %v638
    %v640 = vsel %vm604, %v598, 0.0
    %v641 = vadd.f32 %v639, %v640
    %v642 = vsel %vm604, %v599, 0.0
    %v643 = vadd.f32 %v641, %v642
    %v644 = vsel %vm604, %v600, 0.0
    %v645 = vadd.f32 %v643, %v644
    %v646 = vsel %vm604, %v601, 0.0
    %v647 = vadd.f32 %v645, %v646
    %v648 = vsel %vm604, %v602, 0.0
    %v649 = vadd.f32 %v647, %v648
    %v650 = vsel %vm604, %v603, 0.0
    %v651 = vadd.f32 %v649, %v650
    %652 = vadd.xlane.f32.xlu0 %v651
    %v653 = vpop.xlane.xlu0 %652
    %v654 = vrot.slane %v653, 4
    %v655 = vadd.f32 %v653, %v654
    %v656 = vrot.slane %v655, 2
    %v657 = vadd.f32 %v655, %v656
    %v658 = vrot.slane %v657, 1
    %v659 = vadd.f32 %v657, %v658
    %s660 = vtos %v659
    %s661 = scalar_lea.smem [#allocation5], 0
    %662 = sst [smem:[%s661]] %s660
    // Predicated region
    $region10: #{tpu_custom_call.1} parent=1 // pred_check
      _
    $region11: #{tpu_custom_call.1} parent=1 // pred_check_branch
      %664 = sbr.rel (0) target = $region13
    $region12: #{tpu_custom_call.1} parent=1 // pred_region
      %666 = vsyncadd [#allocation4], 0
      %s668 = sshll.u32 %s1, 4
      %s669 = int_to_ptr.hbm [resolvable:$true] %s668
      %671 = dma.smem_to_hbm [#allocation5], 16, %s669, [#allocation4]
    $region13: #{tpu_custom_call.1} parent=1 // pred_fallthru
      _
    // Predicated region
    $region14: #{tpu_custom_call.1} parent=1 // pred_check
      _
    $region15: #{tpu_custom_call.1} parent=1 // pred_check_branch
      %673 = sbr.rel (0) target = $region17
    $region16: #{tpu_custom_call.1} parent=1 // pred_region
      %675 = dma.done [#allocation4], 16
    $region17: #{tpu_custom_call.1} parent=1 // pred_fallthru
      _
    %676 = sfence
    %677 = vsyncpa [#allocation3], 1
    %678 = vsyncpa [#allocation4], 1

</llo_original>
